<compile_context>
chip_gen: v5e
topology: v5e:2x2
jax: 0.10.0
libtpu: 0.0.40
codegen_flags: <defaults>
</compile_context>

<pallas_src>
import functools

import numpy as np
import jax
import jax.numpy as jnp
from jax import lax
from jax.experimental import pallas as pl
from jax.experimental.pallas import tpu as pltpu


def _cdiv(a, b):
    return -(-a // b)


def _round_up(a, b):
    return _cdiv(a, b) * b


# ----------------------------------------------------------------------------
# FIR taps: windowed-sinc matching scipy.signal.firwin(numtaps, [low, high],
# pass_zero=False, window="hamming"), as used by torch_ecg / biosppy.
# ----------------------------------------------------------------------------
def _firwin_bandpass(numtaps: int, lowcut: float, highcut: float, fs: float):
    nyq = fs / 2.0
    f1 = max(float(lowcut), 0.0) / nyq
    f2 = min(float(highcut), nyq * 0.999) / nyq
    m = np.arange(numtaps) - (numtaps - 1) / 2.0
    h = f2 * np.sinc(f2 * m) - f1 * np.sinc(f1 * m)
    w = 0.54 - 0.46 * np.cos(2.0 * np.pi * np.arange(numtaps) / (numtaps - 1))
    h = h * w
    fc = 0.5 * (f1 + f2)
    h = h / np.sum(h * np.cos(np.pi * fc * m))      # unity gain at band centre
    return h


def _zero_phase_taps(fs: float, lowcut: float, highcut: float):
    order = int(0.3 * fs)                 # torch_ecg: order = int(0.3 * fs)
    numtaps = max(order, 2) + 1
    if numtaps % 2 == 0:
        numtaps += 1                      # Type-I linear phase
    b = _firwin_bandpass(numtaps, lowcut, highcut, fs)
    hz = np.convolve(b, b[::-1])          # filtfilt(b, 1, .) == conv with autocorr(b)
    return hz, (hz.shape[0] - 1) // 2     # taps, one-sided radius P


# ----------------------------------------------------------------------------
# Kernel: per grid step (row tile r, super-block s) produce S output chunks of
# width TT.  Each chunk is one MXU dot of [prev | cur | next] @ W(3TT, TT).
# Edge chunks (left reflection, signal tail + right reflection) are substituted
# in-kernel via scalar-predicated selects; operand tiles are carried so each
# interior chunk is loaded from VMEM exactly once.
# ----------------------------------------------------------------------------
def _make_kernel(S: int, TT: int, n_chunks: int):
    c_last = n_chunks - 1

    def kernel(xm_ref, lh_ref, rh_ref, le_ref, re_ref, w_ref, o_ref):
        s = pl.program_id(1)
        c0 = s * S                                    # global index of chunk j == 0

        # neighbours of the first chunk of this super-block
        prev0 = jnp.where(c0 == 0, le_ref[...], lh_ref[...])
        cur0 = jnp.where(c0 == c_last, re_ref[:, :TT], xm_ref[:, :TT])

        def body(j, carry):
            prev, cur = carry
            c = c0 + j
            # next chunk: in-block, right halo, or tail-extension chunks
            jn = jnp.minimum(j + 1, S - 1)
            nstart = pl.multiple_of(jn * TT, TT)
            nxt = xm_ref[:, pl.ds(nstart, TT)]
            nxt = jnp.where(j == S - 1, rh_ref[...], nxt)       # cross super-block halo
            nxt = jnp.where(c + 1 == c_last, re_ref[:, :TT], nxt)  # next is last real chunk
            nxt = jnp.where(c == c_last, re_ref[:, TT:], nxt)   # beyond the last real chunk

            lhs = jnp.concatenate([prev, cur, nxt], axis=1).astype(jnp.float32)
            y = jnp.dot(lhs, w_ref[...], preferred_element_type=jnp.float32)

            ostart = pl.multiple_of(j * TT, TT)
            o_ref[:, pl.ds(ostart, TT)] = y.astype(o_ref.dtype)
            return (cur, nxt)

        lax.fori_loop(0, S, body, (prev0, cur0), unroll=2 if S > 1 else 1)

    return kernel


# ----------------------------------------------------------------------------
# Wrapper: BandPass.forward equivalent.
# ----------------------------------------------------------------------------
@functools.partial(jax.jit, static_argnames=("fs", "lowcut", "highcut"))
def bandpass(sig: jnp.ndarray, fs: float, lowcut: float = 0.5,
             highcut: float = 45.0) -> jnp.ndarray:
    """sig: (batch, lead, siglen) -> filtered (batch, lead, siglen), same dtype."""
    if lowcut is None or not lowcut:
        lowcut = 0.0
    if highcut is None or not highcut:
        highcut = float("inf")

    B, C, T = sig.shape
    R = B * C
    x = sig.reshape(R, T)                                  # free (contiguous)

    hz, P = _zero_phase_taps(float(fs), float(lowcut), float(highcut))
    K = hz.shape[0]

    # ---- geometry: lane-dense chunking (3-band only needs TT >= P) ----------
    TT = max(128, _round_up(P, 128))                       # chunk width
    n_chunks = _cdiv(T, TT)
    c_last = n_chunks - 1
    rem = T - c_last * TT                                  # valid cols in last chunk

    S = max(1, min(n_chunks, 4096 // TT))                  # chunks per super-block
    if n_chunks >= 2:
        while _cdiv(n_chunks, S) < 2:                      # keep >=2 steps on the
            S = _cdiv(S, 2)                                # parallel axis (megacore)

    R_tile = min(_round_up(R, 8), 128)                     # sublane-aligned row tile
    isz = np.dtype(sig.dtype).itemsize

    def _vmem(S_):                                         # rough per-step footprint
        return (2 * 2 * R_tile * S_ * TT * max(isz, 4)     # xm in + out, dbl-buffered
                + 2 * 2 * 2 * R_tile * TT * isz            # halos, dbl-buffered
                + 3 * R_tile * TT * isz                    # edge inputs
                + 3 * TT * TT * 4)                         # merged weights

    while S > 1 and _vmem(S) > 24 * 1024 * 1024:
        S = _cdiv(S, 2)

    n_super = _cdiv(n_chunks, S)
    n_row_tiles = _cdiv(R, R_tile)

    # ---- tiny edge inputs (touch only O(R*(TT+P)) elements) -----------------
    li = jnp.minimum(jnp.arange(P, 0, -1), T - 1)
    left = (2.0 * x[:, :1] - x[:, li]).astype(sig.dtype)             # x_ext[-P..-1]
    le = jnp.zeros((R, TT), sig.dtype).at[:, TT - P:].set(left)      # x_ext chunk -1

    ri = jnp.maximum(T - 2 - jnp.arange(P), 0)
    right = (2.0 * x[:, -1:] - x[:, ri]).astype(sig.dtype)           # x_ext[T..T+P-1]
    re = jnp.zeros((R, 2 * TT), sig.dtype)
    re = re.at[:, :rem].set(x[:, c_last * TT:])                      # valid tail
    re = re.at[:, rem:rem + P].set(right)                            # odd reflection
    # re[:, :TT] == x_ext chunk c_last,  re[:, TT:] == x_ext chunk c_last + 1

    # ---- merged banded Toeplitz weights (compile-time constant) -------------
    #   W[e, t] = hz[e - TT - t + P]  for e in [0, 3*TT), i.e.
    #   y_c[t] = sum_e x_ext[(c-1)*TT + e] * W[e, t]
    wnp = np.zeros((3 * TT, TT), np.float32)
    for t in range(TT):
        wnp[TT + t - P:TT + t - P + K, t] = hz
    w = jnp.asarray(wnp)

    kernel = _make_kernel(S, TT, n_chunks)
    grid = (n_row_tiles, n_super)

    out = pl.pallas_call(
        kernel,
        out_shape=jax.ShapeDtypeStruct((R, T), sig.dtype),           # exact shape
        grid=grid,
        in_specs=[
            # current super-block of S chunks
            pl.BlockSpec((R_tile, S * TT), lambda r, s: (r, s)),
            # left halo: chunk immediately before the super-block (clamped)
            pl.BlockSpec((R_tile, TT),
                         lambda r, s: (r, jnp.maximum(s * S - 1, 0))),
            # right halo: chunk immediately after the super-block (clamped)
            pl.BlockSpec((R_tile, TT),
                         lambda r, s: (r, jnp.minimum(s * S + S, n_chunks - 1))),
            # left-edge (odd reflection) chunk
            pl.BlockSpec((R_tile, TT), lambda r, s: (r, 0)),
            # tail extension: last real chunk + its reflected successor
            pl.BlockSpec((R_tile, 2 * TT), lambda r, s: (r, 0)),
            # merged banded weights (fetched once; index never changes)
            pl.BlockSpec((3 * TT, TT), lambda r, s: (0, 0)),
        ],
        out_specs=pl.BlockSpec((R_tile, S * TT), lambda r, s: (r, s)),
        compiler_params=pltpu.CompilerParams(
            dimension_semantics=("parallel", "parallel"),
            vmem_limit_bytes=32 * 1024 * 1024),
    )(x, x, x, le, re, w)

    return out.reshape(B, C, T)


if __name__ == "__main__":
    fs = 100.0            # sampling frequency (Hz)
    batch, lead, siglen = 2, 4, 256

    key = jax.random.PRNGKey(0)
    sig = jax.random.normal(key, (batch, lead, siglen), dtype=jnp.float32)

    out = bandpass(sig, fs=fs, lowcut=0.5, highcut=45.0)
    out = jax.block_until_ready(out)

    assert out.shape == (batch, lead, siglen)
    assert out.dtype == sig.dtype
    assert bool(jnp.all(jnp.isfinite(out)))

    # structural sanity check against a NumPy zero-phase FIR reference
    hz, P = _zero_phase_taps(fs, 0.5, 45.0)
    x_np = np.asarray(sig, dtype=np.float64).reshape(batch * lead, siglen)
    xe = np.concatenate(
        [2.0 * x_np[:, :1] - x_np[:, P:0:-1],
         x_np,
         2.0 * x_np[:, -1:] - x_np[:, -2:-2 - P:-1]], axis=1)
    ref = np.stack([np.convolve(xe[r], hz, mode="valid")
                    for r in range(x_np.shape[0])])
    err = float(np.max(np.abs(
        np.asarray(out, dtype=np.float64).reshape(ref.shape) - ref)))
    assert err < 1e-1, f"max abs error vs reference: {err}"

    print("KERNEL_OK")
</pallas_src>

<mosaic_0001>
module attributes {stable_mosaic.version = 11 : i64} {
  func.func @kernel(%arg0: i32, %arg1: i32, %arg2: memref<8x128xf32, #tpu.memory_space<vmem>>, %arg3: memref<8x128xf32, #tpu.memory_space<vmem>>, %arg4: memref<8x128xf32, #tpu.memory_space<vmem>>, %arg5: memref<8x128xf32, #tpu.memory_space<vmem>>, %arg6: memref<8x256xf32, #tpu.memory_space<vmem>>, %arg7: memref<384x128xf32, #tpu.memory_space<vmem>>, %arg8: memref<8x128xf32, #tpu.memory_space<vmem>>) attributes {dimension_semantics = [#tpu.dimension_semantics<parallel>, #tpu.dimension_semantics<parallel>], iteration_bounds = array<i64: 1, 2>, scalar_prefetch = 0 : i64, scratch_operands = 0 : i64, tpu.core_type = #tpu.core_type<tc>, window_params = [{transform_indices = @transform_0, window_bounds = array<i64: 8, 128>}, {transform_indices = @transform_1, window_bounds = array<i64: 8, 128>}, {transform_indices = @transform_2, window_bounds = array<i64: 8, 128>}, {transform_indices = @transform_3, window_bounds = array<i64: 8, 128>}, {transform_indices = @transform_4, window_bounds = array<i64: 8, 256>}, {pipeline_mode = #tpu.pipeline_mode<synchronous>, transform_indices = @transform_5, window_bounds = array<i64: 384, 128>}, {transform_indices = @transform_6, window_bounds = array<i64: 8, 128>}]} {
    %c1_i32 = arith.constant 1 : i32
    %0 = arith.muli %arg1, %c1_i32 : i32
    %c0_i32 = arith.constant 0 : i32
    %1 = arith.cmpi eq, %0, %c0_i32 : i32
    %c0 = arith.constant 0 : index
    %c0_0 = arith.constant 0 : index
    %2 = vector.load %arg5[%c0, %c0_0] : memref<8x128xf32, #tpu.memory_space<vmem>>, vector<8x128xf32>
    %c0_1 = arith.constant 0 : index
    %c0_2 = arith.constant 0 : index
    %3 = vector.load %arg3[%c0_1, %c0_2] : memref<8x128xf32, #tpu.memory_space<vmem>>, vector<8x128xf32>
    %4 = arith.select %1, %2, %3 : vector<8x128xf32>
    %c1_i32_3 = arith.constant 1 : i32
    %5 = arith.cmpi eq, %0, %c1_i32_3 : i32
    %c0_4 = arith.constant 0 : index
    %c0_5 = arith.constant 0 : index
    %6 = vector.load %arg6[%c0_4, %c0_5] : memref<8x256xf32, #tpu.memory_space<vmem>>, vector<8x128xf32>
    %c0_6 = arith.constant 0 : index
    %c0_7 = arith.constant 0 : index
    %7 = vector.load %arg2[%c0_6, %c0_7] : memref<8x128xf32, #tpu.memory_space<vmem>>, vector<8x128xf32>
    %8 = arith.select %5, %6, %7 : vector<8x128xf32>
    %c0_i32_8 = arith.constant 0 : i32
    %9 = arith.addi %0, %c0_i32_8 : i32
    %c1_i32_9 = arith.constant 1 : i32
    %10 = arith.addi %c0_i32_8, %c1_i32_9 : i32
    %c0_i32_10 = arith.constant 0 : i32
    %11 = arith.minsi %10, %c0_i32_10 : i32
    %c128_i32 = arith.constant 128 : i32
    %12 = arith.muli %11, %c128_i32 : i32
    %13 = tpu.assume_multiple %12, 128 : i32
    %c0_11 = arith.constant 0 : index
    %14 = arith.index_cast %13 : i32 to index
    %15 = vector.load %arg2[%c0_11, %14] : memref<8x128xf32, #tpu.memory_space<vmem>>, vector<8x128xf32>
    %c0_i32_12 = arith.constant 0 : i32
    %16 = arith.cmpi eq, %c0_i32_8, %c0_i32_12 : i32
    %c0_13 = arith.constant 0 : index
    %c0_14 = arith.constant 0 : index
    %17 = vector.load %arg4[%c0_13, %c0_14] : memref<8x128xf32, #tpu.memory_space<vmem>>, vector<8x128xf32>
    %18 = arith.select %16, %17, %15 : vector<8x128xf32>
    %c1_i32_15 = arith.constant 1 : i32
    %19 = arith.addi %9, %c1_i32_15 : i32
    %c1_i32_16 = arith.constant 1 : i32
    %20 = arith.cmpi eq, %19, %c1_i32_16 : i32
    %c0_17 = arith.constant 0 : index
    %c0_18 = arith.constant 0 : index
    %21 = vector.load %arg6[%c0_17, %c0_18] : memref<8x256xf32, #tpu.memory_space<vmem>>, vector<8x128xf32>
    %22 = arith.select %20, %21, %18 : vector<8x128xf32>
    %c1_i32_19 = arith.constant 1 : i32
    %23 = arith.cmpi eq, %9, %c1_i32_19 : i32
    %c0_20 = arith.constant 0 : index
    %c128 = arith.constant 128 : index
    %24 = vector.load %arg6[%c0_20, %c128] : memref<8x256xf32, #tpu.memory_space<vmem>>, vector<8x128xf32>
    %25 = arith.select %23, %24, %22 : vector<8x128xf32>
    %26 = tpu.concatenate %4, %8, %25 in 1 : vector<8x128xf32>, vector<8x128xf32>, vector<8x128xf32> -> vector<8x384xf32>
    %c0_21 = arith.constant 0 : index
    %c0_22 = arith.constant 0 : index
    %27 = vector.load %arg7[%c0_21, %c0_22] : memref<384x128xf32, #tpu.memory_space<vmem>>, vector<384x128xf32>
    %cst = arith.constant dense<0.000000e+00> : vector<8x128xf32>
    %28 = tpu.matmul %26, %27, %cst {dimension_numbers = #tpu.dot_dimension_numbers<[1], [0], [0], [1], [0, 0, 1, 1], [], []>} : vector<8x384xf32>, vector<384x128xf32>, vector<8x128xf32> -> vector<8x128xf32>
    %c128_i32_23 = arith.constant 128 : i32
    %29 = arith.muli %c0_i32_8, %c128_i32_23 : i32
    %30 = tpu.assume_multiple %29, 128 : i32
    %c0_24 = arith.constant 0 : index
    %31 = arith.index_cast %30 : i32 to index
    %32 = vector.load %arg8[%c0_24, %31] : memref<8x128xf32, #tpu.memory_space<vmem>>, vector<8x128xf32>
    tpu.vector_store %arg8[%c0_24, %31], %28 {strides = array<i32>} : memref<8x128xf32, #tpu.memory_space<vmem>>, vector<8x128xf32>,
    %c1_i32_25 = arith.constant 1 : i32
    return
  }
  func.func @transform_0(%arg0: i32, %arg1: i32) -> (i32, i32) {
    %c0_i32 = arith.constant 0 : i32
    return %arg0, %arg1 : i32, i32
  }
  func.func @transform_1(%arg0: i32, %arg1: i32) -> (i32, i32) {
    %c1_i32 = arith.constant 1 : i32
    %0 = arith.muli %arg1, %c1_i32 : i32
    %c1_i32_0 = arith.constant 1 : i32
    %1 = arith.subi %0, %c1_i32_0 : i32
    %c0_i32 = arith.constant 0 : i32
    %2 = arith.maxsi %1, %c0_i32 : i32
    %c0_i32_1 = arith.constant 0 : i32
    return %arg0, %2 : i32, i32
  }
  func.func @transform_2(%arg0: i32, %arg1: i32) -> (i32, i32) {
    %c1_i32 = arith.constant 1 : i32
    %0 = arith.muli %arg1, %c1_i32 : i32
    %c1_i32_0 = arith.constant 1 : i32
    %1 = arith.addi %0, %c1_i32_0 : i32
    %c1_i32_1 = arith.constant 1 : i32
    %2 = arith.minsi %1, %c1_i32_1 : i32
    %c0_i32 = arith.constant 0 : i32
    return %arg0, %2 : i32, i32
  }
  func.func @transform_3(%arg0: i32, %arg1: i32) -> (i32, i32) {
    %c0_i32 = arith.constant 0 : i32
    %c0_i32_0 = arith.constant 0 : i32
    return %arg0, %c0_i32 : i32, i32
  }
  func.func @transform_4(%arg0: i32, %arg1: i32) -> (i32, i32) {
    %c0_i32 = arith.constant 0 : i32
    %c0_i32_0 = arith.constant 0 : i32
    return %arg0, %c0_i32 : i32, i32
  }
  func.func @transform_5(%arg0: i32, %arg1: i32) -> (i32, i32) {
    %c0_i32 = arith.constant 0 : i32
    %c0_i32_0 = arith.constant 0 : i32
    %c0_i32_1 = arith.constant 0 : i32
    return %c0_i32, %c0_i32_0 : i32, i32
  }
  func.func @transform_6(%arg0: i32, %arg1: i32) -> (i32, i32) {
    %c0_i32 = arith.constant 0 : i32
    return %arg0, %arg1 : i32, i32
  }
}

</mosaic_0001>

<llo_original>
// kernel: bandpass.1
$region0: #{bandpass.1}
  #allocation0 [shape = 'u32[]', space=smem, size = 0x4, offset = 0x4, fixed_abs, tag = 'smem constant byte address 0x4 - core index']
  #allocation1 [shape = 'u32[72,128]{1,0:T(1,128)}', space=vmem, size = 0x9000, scoped, tag = 'internal scratch']
  %s0 = inlined_call_operand.vmem [shape: f32[8,256], index: 0, kind: input, shape index: {}, may-alias: {0,1,2}]
  %s1 = inlined_call_operand.vmem [shape: f32[8,256], index: 1, kind: input, shape index: {}, may-alias: {0,1,2}]
  %s2 = inlined_call_operand.vmem [shape: f32[8,256], index: 2, kind: input, shape index: {}, may-alias: {0,1,2}]
  %s3 = inlined_call_operand.vmem [shape: f32[8,128], index: 3, kind: input, shape index: {}]
  %s4 = inlined_call_operand.vmem [shape: f32[8,256], index: 4, kind: input, shape index: {}]
  %s5 = inlined_call_operand.vmem [shape: f32[384,128], index: 5, kind: input, shape index: {}]
  %s6 = inlined_call_operand.vmem [shape: f32[8,256], index: 6, kind: output, shape index: {}]
  %s7 = sld [smem:[#allocation0]]
  $region57: #{bandpass.1} parent=0
    _
  %s9 = ssub.s32 1, %s7
  %s10 = scalar_select 0, %s9, %s7
  loop: start=0, step=1, limit=4
  $region2: #{bandpass.1} parent=0 // loop_pre_header
    _
  $region3: #{bandpass.1} parent=0 // loop_header
    %s12 = sphi 0, %s16
    %p13 = scmp.ge.s32.totalorder %s12, 4
    %s19 = sphi 0, %s31
    %s20 = sphi 0, %s27
    %s21 = sphi 0, %s19
    %s22 = sphi 0, %s20
    %s23 = sphi 0, %s21
    %s24 = sphi 0, %s22
    %s36 = sphi 0, %s38
    %s39 = sphi 0, %s36
    %s40 = sphi 0, %s39
    %s56 = sphi 0, %s40
    %s70 = sphi 0, %s72
    %s73 = sphi 0, %s70
    %s74 = sphi 0, %s73
    %s90 = sphi 0, %s74
    %s104 = sphi 0, %s106
    %s107 = sphi 0, %s104
    %s108 = sphi 0, %s107
    %s124 = sphi 0, %s108
    %s130 = sphi 0, %s132
    %s133 = sphi 0, %s130
    %s134 = sphi 0, %s133
    %s150 = sphi 0, %s134
    %s156 = sphi 0, %s158
    %s159 = sphi 0, %s156
    %s160 = sphi 0, %s159
    %s176 = sphi 0, %s160
    %s180 = sphi 0, %s180
    %s182 = sphi 0, %s180
    %s183 = sphi 0, %s182
    %s197 = sphi 0, %s183
    %s205 = sphi 0, %s207
    %s208 = sphi 0, %s205
    %s209 = sphi 0, %s208
    %s225 = sphi 0, %s209
  $region4: #{bandpass.1} parent=0 // loop_header_branch
    %15 = sbr.rel (%p13) target = $region8
  $region5: #{bandpass.1} parent=0 // loop_body
    %s17 = ssub.s32 %s12, 1
    %s18 = ssub.s32 %s12, 2
    %s25 = sadd.s32 1, %s20
    %p26 = scmp.ge.s32.totalorder %s25, 2
    %s27 = scalar_select %p26, 0, %s25
    %s28 = sadd.s32 1, %s19
    %s29 = scalar_select %p26, %s28, %s19
    %p30 = scmp.ge.s32.totalorder %s29, 1
    %s31 = scalar_select %p30, 0, %s29
    %s32 = ssub.s32 %s19, %s31
    %s33 = ssub.s32 %s20, %s27
    %s34 = sor.u32 %s32, %s33
    %p35 = scmp.eq.s32.totalorder %s34, 0
    %s37 = sadd.s32 %s36, 1
    %s38 = scalar_select %p35, %s36, %s37
    %p41 = pneg %p35
    %p42 = scmp.eq.s32.totalorder %s12, 1
    %p43 = por %p41, %p42
    %p44 = scmp.ne.s32.totalorder %s36, %s39
    %p45 = scmp.eq.s32.totalorder %s12, 0
    %p46 = por %p44, %p45
    %p47 = scmp.ne.s32.totalorder %s36, %s39
    %p48 = scmp.eq.s32.totalorder %s17, 1
    %p49 = por %p47, %p48
    %p50 = scmp.ne.s32.totalorder %s39, %s40
    %p51 = scmp.eq.s32.totalorder %s17, 0
    %p52 = por %p50, %p51
    %p53 = scmp.ne.s32.totalorder %s39, %s40
    %p54 = scmp.eq.s32.totalorder %s18, 1
    %p55 = por %p53, %p54
    %p57 = scmp.ne.s32.totalorder %s40, %s56
    %p58 = scmp.eq.s32.totalorder %s18, 0
    %p59 = por %p57, %p58
    %s60 = ssub.s32 %s20, 1
    %p61 = scmp.gt.s32.totalorder %s60, 0
    %s62 = scalar_select %p61, %s60, 0
    %s63 = ssub.s32 %s27, 1
    %p64 = scmp.gt.s32.totalorder %s63, 0
    %s65 = scalar_select %p64, %s63, 0
    %s66 = ssub.s32 %s19, %s31
    %s67 = ssub.s32 %s62, %s65
    %s68 = sor.u32 %s66, %s67
    %p69 = scmp.eq.s32.totalorder %s68, 0
    %s71 = sadd.s32 %s70, 1
    %s72 = scalar_select %p69, %s70, %s71
    %p75 = pneg %p69
    %p76 = scmp.eq.s32.totalorder %s12, 1
    %p77 = por %p75, %p76
    %p78 = scmp.ne.s32.totalorder %s70, %s73
    %p79 = scmp.eq.s32.totalorder %s12, 0
    %p80 = por %p78, %p79
    %p81 = scmp.ne.s32.totalorder %s70, %s73
    %p82 = scmp.eq.s32.totalorder %s17, 1
    %p83 = por %p81, %p82
    %p84 = scmp.ne.s32.totalorder %s73, %s74
    %p85 = scmp.eq.s32.totalorder %s17, 0
    %p86 = por %p84, %p85
    %p87 = scmp.ne.s32.totalorder %s73, %s74
    %p88 = scmp.eq.s32.totalorder %s18, 1
    %p89 = por %p87, %p88
    %p91 = scmp.ne.s32.totalorder %s74, %s90
    %p92 = scmp.eq.s32.totalorder %s18, 0
    %p93 = por %p91, %p92
    %s94 = sadd.s32 %s20, 1
    %p95 = scmp.lt.s32.totalorder %s94, 1
    %s96 = scalar_select %p95, %s94, 1
    %s97 = sadd.s32 %s27, 1
    %p98 = scmp.lt.s32.totalorder %s97, 1
    %s99 = scalar_select %p98, %s97, 1
    %s100 = ssub.s32 %s19, %s31
    %s101 = ssub.s32 %s96, %s99
    %s102 = sor.u32 %s100, %s101
    %p103 = scmp.eq.s32.totalorder %s102, 0
    %s105 = sadd.s32 %s104, 1
    %s106 = scalar_select %p103, %s104, %s105
    %p109 = pneg %p103
    %p110 = scmp.eq.s32.totalorder %s12, 1
    %p111 = por %p109, %p110
    %p112 = scmp.ne.s32.totalorder %s104, %s107
    %p113 = scmp.eq.s32.totalorder %s12, 0
    %p114 = por %p112, %p113
    %p115 = scmp.ne.s32.totalorder %s104, %s107
    %p116 = scmp.eq.s32.totalorder %s17, 1
    %p117 = por %p115, %p116
    %p118 = scmp.ne.s32.totalorder %s107, %s108
    %p119 = scmp.eq.s32.totalorder %s17, 0
    %p120 = por %p118, %p119
    %p121 = scmp.ne.s32.totalorder %s107, %s108
    %p122 = scmp.eq.s32.totalorder %s18, 1
    %p123 = por %p121, %p122
    %p125 = scmp.ne.s32.totalorder %s108, %s124
    %p126 = scmp.eq.s32.totalorder %s18, 0
    %p127 = por %p125, %p126
    %s128 = ssub.s32 %s19, %s31
    %p129 = scmp.eq.s32.totalorder %s128, 0
    %s131 = sadd.s32 %s130, 1
    %s132 = scalar_select %p129, %s130, %s131
    %p135 = pneg %p129
    %p136 = scmp.eq.s32.totalorder %s12, 1
    %p137 = por %p135, %p136
    %p138 = scmp.ne.s32.totalorder %s130, %s133
    %p139 = scmp.eq.s32.totalorder %s12, 0
    %p140 = por %p138, %p139
    %p141 = scmp.ne.s32.totalorder %s130, %s133
    %p142 = scmp.eq.s32.totalorder %s17, 1
    %p143 = por %p141, %p142
    %p144 = scmp.ne.s32.totalorder %s133, %s134
    %p145 = scmp.eq.s32.totalorder %s17, 0
    %p146 = por %p144, %p145
    %p147 = scmp.ne.s32.totalorder %s133, %s134
    %p148 = scmp.eq.s32.totalorder %s18, 1
    %p149 = por %p147, %p148
    %p151 = scmp.ne.s32.totalorder %s134, %s150
    %p152 = scmp.eq.s32.totalorder %s18, 0
    %p153 = por %p151, %p152
    %s154 = ssub.s32 %s19, %s31
    %p155 = scmp.eq.s32.totalorder %s154, 0
    %s157 = sadd.s32 %s156, 1
    %s158 = scalar_select %p155, %s156, %s157
    %p161 = pneg %p155
    %p162 = scmp.eq.s32.totalorder %s12, 1
    %p163 = por %p161, %p162
    %p164 = scmp.ne.s32.totalorder %s156, %s159
    %p165 = scmp.eq.s32.totalorder %s12, 0
    %p166 = por %p164, %p165
    %p167 = scmp.ne.s32.totalorder %s156, %s159
    %p168 = scmp.eq.s32.totalorder %s17, 1
    %p169 = por %p167, %p168
    %p170 = scmp.ne.s32.totalorder %s159, %s160
    %p171 = scmp.eq.s32.totalorder %s17, 0
    %p172 = por %p170, %p171
    %p173 = scmp.ne.s32.totalorder %s159, %s160
    %p174 = scmp.eq.s32.totalorder %s18, 1
    %p175 = por %p173, %p174
    %p177 = scmp.ne.s32.totalorder %s160, %s176
    %p178 = scmp.eq.s32.totalorder %s18, 0
    %p179 = por %p177, %p178
    %s181 = sadd.s32 %s180, 1
    %p184 = scmp.eq.s32.totalorder %s12, 1
    %p185 = scmp.ne.s32.totalorder %s180, %s182
    %p186 = scmp.eq.s32.totalorder %s12, 0
    %p187 = por %p185, %p186
    %p188 = scmp.ne.s32.totalorder %s180, %s182
    %p189 = scmp.eq.s32.totalorder %s17, 1
    %p190 = por %p188, %p189
    %p191 = scmp.ne.s32.totalorder %s182, %s183
    %p192 = scmp.eq.s32.totalorder %s17, 0
    %p193 = por %p191, %p192
    %p194 = scmp.ne.s32.totalorder %s182, %s183
    %p195 = scmp.eq.s32.totalorder %s18, 1
    %p196 = por %p194, %p195
    %p198 = scmp.ne.s32.totalorder %s183, %s197
    %p199 = scmp.eq.s32.totalorder %s18, 0
    %p200 = por %p198, %p199
    %s201 = ssub.s32 %s19, %s31
    %s202 = ssub.s32 %s20, %s27
    %s203 = sor.u32 %s201, %s202
    %p204 = scmp.eq.s32.totalorder %s203, 0
    %s206 = sadd.s32 %s205, 1
    %s207 = scalar_select %p204, %s205, %s206
    %p210 = pneg %p204
    %p211 = scmp.eq.s32.totalorder %s12, 1
    %p212 = por %p210, %p211
    %p213 = scmp.ne.s32.totalorder %s205, %s208
    %p214 = scmp.eq.s32.totalorder %s12, 0
    %p215 = por %p213, %p214
    %p216 = scmp.ne.s32.totalorder %s205, %s208
    %p217 = scmp.eq.s32.totalorder %s17, 1
    %p218 = por %p216, %p217
    %p219 = scmp.ne.s32.totalorder %s208, %s209
    %p220 = scmp.eq.s32.totalorder %s17, 0
    %p221 = por %p219, %p220
    %p222 = scmp.ne.s32.totalorder %s208, %s209
    %p223 = scmp.eq.s32.totalorder %s18, 1
    %p224 = por %p222, %p223
    %p226 = scmp.ne.s32.totalorder %s209, %s225
    %p227 = scmp.eq.s32.totalorder %s18, 0
    %p228 = por %p226, %p227
    %p229 = scmp.le.s32.totalorder 1, %s12
    %p230 = scmp.lt.s32.totalorder %s12, 3
    %p231 = pnand %p229, %p230
    %p232 = pneg %p231
    // Predicated region
    $region9: #{bandpass.1} parent=5 // pred_check
      _
    $region10: #{bandpass.1} parent=5 // pred_check_branch
      %234 = sbr.rel (%p231) target = $region12
    $region11: #{bandpass.1} parent=5 // pred_region
      %s235 = ssub.s32 %s12, 1
      // Predicated region
      $region13: #{bandpass.1} parent=11 // pred_check
        %p236 = pneg %p146
      $region14: #{bandpass.1} parent=11 // pred_check_branch
        %238 = sbr.rel (%p236) target = $region16
      $region15: #{bandpass.1} parent=11 // pred_region
        %p239 = scmp.lt.s32.totalorder %s21, 0
        %s240 = scalar_select %p239, %s21, 0
        %s241 = smul.addr %s240, 8
        %s242 = scalar_lea.vmem %s3, %s241
      $region16: #{bandpass.1} parent=11 // pred_fallthru
        _
      // Predicated region
      $region17: #{bandpass.1} parent=11 // pred_check
        %p243 = pneg %p172
      $region18: #{bandpass.1} parent=11 // pred_check_branch
        %245 = sbr.rel (%p243) target = $region20
      $region19: #{bandpass.1} parent=11 // pred_region
        %p246 = scmp.lt.s32.totalorder %s21, 0
        %s247 = scalar_select %p246, %s21, 0
        %s248 = smul.addr %s247, 2
        %s249 = smul.addr %s248, 8
        %s250 = scalar_lea.vmem %s4, %s249
      $region20: #{bandpass.1} parent=11 // pred_fallthru
        _
      // Predicated region
      $region21: #{bandpass.1} parent=11 // pred_check
        %p251 = pneg %p193
      $region22: #{bandpass.1} parent=11 // pred_check_branch
        %253 = sbr.rel (%p251) target = $region24
      $region23: #{bandpass.1} parent=11 // pred_region
        _
      $region24: #{bandpass.1} parent=11 // pred_fallthru
        _
    $region12: #{bandpass.1} parent=5 // pred_fallthru
      _
    %p254 = scmp.lt.s32.totalorder %s12, 2
    // Predicated region
    $region25: #{bandpass.1} parent=5 // pred_check
      %p255 = pneg %p254
    $region26: #{bandpass.1} parent=5 // pred_check_branch
      %257 = sbr.rel (%p255) target = $region28
    $region27: #{bandpass.1} parent=5 // pred_region
      // Predicated region
      $region29: #{bandpass.1} parent=27 // pred_check
        %p258 = pneg %p46
      $region30: #{bandpass.1} parent=27 // pred_check_branch
        %260 = sbr.rel (%p258) target = $region32
      $region31: #{bandpass.1} parent=27 // pred_region
        %p261 = scmp.lt.s32.totalorder %s19, 0
        %s262 = scalar_select %p261, %s19, 0
        %p263 = scmp.lt.s32.totalorder %s20, 1
        %s264 = scalar_select %p263, %s20, 1
        %s265 = smul.addr %s262, 2
        %s266 = sadd.s32 %s264, %s265
        %s267 = smul.addr %s266, 8
        %s268 = scalar_lea.vmem %s0, %s267
      $region32: #{bandpass.1} parent=27 // pred_fallthru
        _
      // Predicated region
      $region33: #{bandpass.1} parent=27 // pred_check
        %p269 = pneg %p80
      $region34: #{bandpass.1} parent=27 // pred_check_branch
        %271 = sbr.rel (%p269) target = $region36
      $region35: #{bandpass.1} parent=27 // pred_region
        %s272 = ssub.s32 %s20, 1
        %p273 = scmp.gt.s32.totalorder %s272, 0
        %s274 = scalar_select %p273, %s272, 0
        %p275 = scmp.lt.s32.totalorder %s19, 0
        %s276 = scalar_select %p275, %s19, 0
        %p277 = scmp.lt.s32.totalorder %s274, 1
        %s278 = scalar_select %p277, %s274, 1
        %s279 = smul.addr %s276, 2
        %s280 = sadd.s32 %s278, %s279
        %s281 = smul.addr %s280, 8
        %s282 = scalar_lea.vmem %s1, %s281
        %s283 = ssub.s32 %s20, 1
        %p284 = scmp.gt.s32.totalorder %s283, 0
        %s285 = scalar_select %p284, %s283, 0
      $region36: #{bandpass.1} parent=27 // pred_fallthru
        _
      // Predicated region
      $region37: #{bandpass.1} parent=27 // pred_check
        %p286 = pneg %p114
      $region38: #{bandpass.1} parent=27 // pred_check_branch
        %288 = sbr.rel (%p286) target = $region40
      $region39: #{bandpass.1} parent=27 // pred_region
        %s289 = sadd.s32 %s20, 1
        %p290 = scmp.lt.s32.totalorder %s289, 1
        %s291 = scalar_select %p290, %s289, 1
        %p292 = scmp.lt.s32.totalorder %s19, 0
        %s293 = scalar_select %p292, %s19, 0
        %p294 = scmp.lt.s32.totalorder %s291, 1
        %s295 = scalar_select %p294, %s291, 1
        %s296 = smul.addr %s293, 2
        %s297 = sadd.s32 %s295, %s296
        %s298 = smul.addr %s297, 8
        %s299 = scalar_lea.vmem %s2, %s298
        %s300 = sadd.s32 %s20, 1
        %p301 = scmp.lt.s32.totalorder %s300, 1
        %s302 = scalar_select %p301, %s300, 1
      $region40: #{bandpass.1} parent=27 // pred_fallthru
        _
    $region28: #{bandpass.1} parent=5 // pred_fallthru
      _
    %p303 = scmp.le.s32.totalorder 1, %s12
    %p304 = scmp.lt.s32.totalorder %s12, 3
    %p305 = pnand %p303, %p304
    %p306 = pneg %p305
    // Predicated region
    $region41: #{bandpass.1} parent=5 // pred_check
      _
    $region42: #{bandpass.1} parent=5 // pred_check_branch
      %308 = sbr.rel (%p305) target = $region44
    $region43: #{bandpass.1} parent=5 // pred_region
      %s309 = ssub.s32 %s12, 1
      %p310 = scmp.lt.s32.totalorder %s21, 0
      %s311 = scalar_select %p310, %s21, 0
      %p312 = scmp.lt.s32.totalorder %s22, 1
      %s313 = scalar_select %p312, %s22, 1
      %s314 = smul.addr %s311, 2
      %s315 = sadd.s32 %s313, %s314
      %s316 = smul.addr %s315, 8
      %s317 = scalar_lea.vmem %s0, %s316
      %p318 = pneg %p52
      %p319 = pneg %p49
      %s320 = ssub.s32 %s22, 1
      %p321 = scmp.gt.s32.totalorder %s320, 0
      %s322 = scalar_select %p321, %s320, 0
      %p323 = scmp.lt.s32.totalorder %s21, 0
      %s324 = scalar_select %p323, %s21, 0
      %p325 = scmp.lt.s32.totalorder %s322, 1
      %s326 = scalar_select %p325, %s322, 1
      %s327 = smul.addr %s324, 2
      %s328 = sadd.s32 %s326, %s327
      %s329 = smul.addr %s328, 8
      %s330 = scalar_lea.vmem %s1, %s329
      %p331 = pneg %p86
      %p332 = pneg %p83
      %s333 = sadd.s32 %s22, 1
      %p334 = scmp.lt.s32.totalorder %s333, 1
      %s335 = scalar_select %p334, %s333, 1
      %p336 = scmp.lt.s32.totalorder %s21, 0
      %s337 = scalar_select %p336, %s21, 0
      %p338 = scmp.lt.s32.totalorder %s335, 1
      %s339 = scalar_select %p338, %s335, 1
      %s340 = smul.addr %s337, 2
      %s341 = sadd.s32 %s339, %s340
      %s342 = smul.addr %s341, 8
      %s343 = scalar_lea.vmem %s2, %s342
      %p344 = pneg %p120
      %p345 = pneg %p117
      %p346 = scmp.lt.s32.totalorder %s21, 0
      %s347 = scalar_select %p346, %s21, 0
      %s348 = smul.addr %s347, 8
      %s349 = scalar_lea.vmem %s3, %s348
      %p350 = pneg %p146
      %p351 = pneg %p143
      %p352 = scmp.lt.s32.totalorder %s21, 0
      %s353 = scalar_select %p352, %s21, 0
      %s354 = smul.addr %s353, 2
      %s355 = smul.addr %s354, 8
      %s356 = scalar_lea.vmem %s4, %s355
      %p357 = pneg %p172
      %p358 = pneg %p169
      %p359 = pneg %p193
      %p360 = pneg %p190
      %p361 = pneg %p221
      %p362 = pneg %p218
      %p363 = scmp.lt.s32.totalorder %s21, 0
      %s364 = scalar_select %p363, %s21, 0
      %p365 = scmp.lt.s32.totalorder %s22, 1
      %s366 = scalar_select %p365, %s22, 1
      %s367 = smul.addr %s364, 2
      %s368 = sadd.s32 %s366, %s367
      %s369 = smul.addr %s368, 8
      %s370 = scalar_lea.vmem %s6, %s369
      %p371 = scmp.lt.s32.totalorder %s21, 0
      %s372 = scalar_select %p371, %s21, 0
      %p373 = scmp.lt.s32.totalorder %s22, 1
      %s374 = scalar_select %p373, %s22, 1
      %s375 = smul.addr %s372, 2
      %s376 = sadd.s32 %s374, %s375
      %s377 = smul.addr %s376, 8
      %s378 = scalar_lea.vmem %s0, %s377
      %s379 = ssub.s32 %s22, 1
      %p380 = scmp.gt.s32.totalorder %s379, 0
      %s381 = scalar_select %p380, %s379, 0
      %p382 = scmp.lt.s32.totalorder %s21, 0
      %s383 = scalar_select %p382, %s21, 0
      %p384 = scmp.lt.s32.totalorder %s381, 1
      %s385 = scalar_select %p384, %s381, 1
      %s386 = smul.addr %s383, 2
      %s387 = sadd.s32 %s385, %s386
      %s388 = smul.addr %s387, 8
      %s389 = scalar_lea.vmem %s1, %s388
      %s390 = ssub.s32 %s22, 1
      %p391 = scmp.gt.s32.totalorder %s390, 0
      %s392 = scalar_select %p391, %s390, 0
      %s393 = sadd.s32 %s22, 1
      %p394 = scmp.lt.s32.totalorder %s393, 1
      %s395 = scalar_select %p394, %s393, 1
      %p396 = scmp.lt.s32.totalorder %s21, 0
      %s397 = scalar_select %p396, %s21, 0
      %p398 = scmp.lt.s32.totalorder %s395, 1
      %s399 = scalar_select %p398, %s395, 1
      %s400 = smul.addr %s397, 2
      %s401 = sadd.s32 %s399, %s400
      %s402 = smul.addr %s401, 8
      %s403 = scalar_lea.vmem %s2, %s402
      %s404 = sadd.s32 %s22, 1
      %p405 = scmp.lt.s32.totalorder %s404, 1
      %s406 = scalar_select %p405, %s404, 1
      %p407 = scmp.lt.s32.totalorder %s21, 0
      %s408 = scalar_select %p407, %s21, 0
      %s409 = smul.addr %s408, 8
      %s410 = scalar_lea.vmem %s3, %s409
      %p411 = scmp.lt.s32.totalorder %s21, 0
      %s412 = scalar_select %p411, %s21, 0
      %s413 = smul.addr %s412, 2
      %s414 = smul.addr %s413, 8
      %s415 = scalar_lea.vmem %s4, %s414
      %p416 = scmp.lt.s32.totalorder %s21, 0
      %s417 = scalar_select %p416, %s21, 0
      %p418 = scmp.lt.s32.totalorder %s22, 1
      %s419 = scalar_select %p418, %s22, 1
      %s420 = smul.addr %s417, 2
      %s421 = sadd.s32 %s419, %s420
      %s422 = smul.addr %s421, 8
      %s423 = scalar_lea.vmem %s6, %s422
      %p424 = scmp.eq.s32.totalorder %s22, 0
      %v425 = vld [vmem:[%s410] sm:$0xff]
      %v426 = vld [vmem:[%s389] sm:$0xff]
      %s427 = scalar_select %p424, 1, 0
      %v428 = vstv %s427
      %vm429 = vcmp.eq.s32.totalorder %v428, 1
      %v430 = vsel %vm429, %v425, %v426
      %p431 = scmp.eq.s32.totalorder %s22, 1
      %v432 = vld [vmem:[%s415] sm:$0xff]
      %v433 = vld [vmem:[%s378] sm:$0xff]
      %s434 = scalar_select %p431, 1, 0
      %v435 = vstv %s434
      %vm436 = vcmp.eq.s32.totalorder %v435, 1
      %v437 = vsel %vm436, %v432, %v433
      %v438 = vld [vmem:[%s403] sm:$0xff]
      %s439 = sadd.s32 %s22, 1
      %p440 = scmp.eq.s32.totalorder %s439, 1
      %s441 = scalar_select %p440, 1, 0
      %v442 = vstv %s441
      %vm443 = vcmp.eq.s32.totalorder %v442, 1
      %v444 = vsel %vm443, %v432, %v438
      %v445 = vld [vmem:[%s415 + $0x8] sm:$0xff]
      %v446 = vsel %vm436, %v445, %v444
      %v447 = vld [vmem:[%s5] sm:$0xff]
      %v448 = vld [vmem:[%s5 + $0x8] sm:$0xff]
      %v449 = vld [vmem:[%s5 + $0x10] sm:$0xff]
      %v450 = vld [vmem:[%s5 + $0x18] sm:$0xff]
      %v451 = vld [vmem:[%s5 + $0x20] sm:$0xff]
      %v452 = vld [vmem:[%s5 + $0x28] sm:$0xff]
      %v453 = vld [vmem:[%s5 + $0x30] sm:$0xff]
      %v454 = vld [vmem:[%s5 + $0x38] sm:$0xff]
      %v455 = vld [vmem:[%s5 + $0x40] sm:$0xff]
      %v456 = vld [vmem:[%s5 + $0x48] sm:$0xff]
      %v457 = vld [vmem:[%s5 + $0x50] sm:$0xff]
      %v458 = vld [vmem:[%s5 + $0x58] sm:$0xff]
      %v459 = vld [vmem:[%s5 + $0x60] sm:$0xff]
      %v460 = vld [vmem:[%s5 + $0x68] sm:$0xff]
      %v461 = vld [vmem:[%s5 + $0x70] sm:$0xff]
      %v462 = vld [vmem:[%s5 + $0x78] sm:$0xff]
      %v463 = vld [vmem:[%s5 + $0x80] sm:$0xff]
      %v464 = vld [vmem:[%s5 + $0x88] sm:$0xff]
      %v465 = vld [vmem:[%s5 + $0x90] sm:$0xff]
      %v466 = vld [vmem:[%s5 + $0x98] sm:$0xff]
      %v467 = vld [vmem:[%s5 + $0xa0] sm:$0xff]
      %v468 = vld [vmem:[%s5 + $0xa8] sm:$0xff]
      %v469 = vld [vmem:[%s5 + $0xb0] sm:$0xff]
      %v470 = vld [vmem:[%s5 + $0xb8] sm:$0xff]
      %v471 = vld [vmem:[%s5 + $0xc0] sm:$0xff]
      %v472 = vld [vmem:[%s5 + $0xc8] sm:$0xff]
      %v473 = vld [vmem:[%s5 + $0xd0] sm:$0xff]
      %v474 = vld [vmem:[%s5 + $0xd8] sm:$0xff]
      %v475 = vld [vmem:[%s5 + $0xe0] sm:$0xff]
      %v476 = vld [vmem:[%s5 + $0xe8] sm:$0xff]
      %v477 = vld [vmem:[%s5 + $0xf0] sm:$0xff]
      %v478 = vld [vmem:[%s5 + $0xf8] sm:$0xff]
      %v479 = vld [vmem:[%s5 + $0x100] sm:$0xff]
      %v480 = vld [vmem:[%s5 + $0x108] sm:$0xff]
      %v481 = vld [vmem:[%s5 + $0x110] sm:$0xff]
      %v482 = vld [vmem:[%s5 + $0x118] sm:$0xff]
      %v483 = vld [vmem:[%s5 + $0x120] sm:$0xff]
      %v484 = vld [vmem:[%s5 + $0x128] sm:$0xff]
      %v485 = vld [vmem:[%s5 + $0x130] sm:$0xff]
      %v486 = vld [vmem:[%s5 + $0x138] sm:$0xff]
      %v487 = vld [vmem:[%s5 + $0x140] sm:$0xff]
      %v488 = vld [vmem:[%s5 + $0x148] sm:$0xff]
      %v489 = vld [vmem:[%s5 + $0x150] sm:$0xff]
      %v490 = vld [vmem:[%s5 + $0x158] sm:$0xff]
      %v491 = vld [vmem:[%s5 + $0x160] sm:$0xff]
      %v492 = vld [vmem:[%s5 + $0x168] sm:$0xff]
      %v493 = vld [vmem:[%s5 + $0x170] sm:$0xff]
      %v494 = vld [vmem:[%s5 + $0x178] sm:$0xff]
      %495 = vmatpush.msra.mxu0 %v462
      %496 = vmatpush.msra.mxu0 %v461
      %497 = vmatpush.msra.mxu0 %v460
      %498 = vmatpush.msra.mxu0 %v459
      %499 = vmatpush.msra.mxu0 %v458
      %500 = vmatpush.msra.mxu0 %v457
      %501 = vmatpush.msra.mxu0 %v456
      %502 = vmatpush.msra.mxu0 %v455
      %503 = vmatpush.msra.mxu0 %v454
      %504 = vmatpush.msra.mxu0 %v453
      %505 = vmatpush.msra.mxu0 %v452
      %506 = vmatpush.msra.mxu0 %v451
      %507 = vmatpush.msra.mxu0 %v450
      %508 = vmatpush.msra.mxu0 %v449
      %509 = vmatpush.msra.mxu0 %v448
      %510 = vmatpush.msra.mxu0 %v447
      %511 = vmatmul.f32.gmra.mxu0 %v430
      %v512 = vpop.f32.mrf.mxu0
      %v513 = vadd.f32 0.0, %v512
      %514 = vdwg.mxu0
      %515 = vmatpush.msra.mxu0 %v478
      %516 = vmatpush.msra.mxu0 %v477
      %517 = vmatpush.msra.mxu0 %v476
      %518 = vmatpush.msra.mxu0 %v475
      %519 = vmatpush.msra.mxu0 %v474
      %520 = vmatpush.msra.mxu0 %v473
      %521 = vmatpush.msra.mxu0 %v472
      %522 = vmatpush.msra.mxu0 %v471
      %523 = vmatpush.msra.mxu0 %v470
      %524 = vmatpush.msra.mxu0 %v469
      %525 = vmatpush.msra.mxu0 %v468
      %526 = vmatpush.msra.mxu0 %v467
      %527 = vmatpush.msra.mxu0 %v466
      %528 = vmatpush.msra.mxu0 %v465
      %529 = vmatpush.msra.mxu0 %v464
      %530 = vmatpush.msra.mxu0 %v463
      %531 = vmatmul.f32.gmra.mxu0 %v437
      %v532 = vpop.f32.mrf.mxu0
      %v533 = vadd.f32 %v513, %v532
      %534 = vdwg.mxu0
      %535 = vmatpush.msra.mxu0 %v494
      %536 = vmatpush.msra.mxu0 %v493
      %537 = vmatpush.msra.mxu0 %v492
      %538 = vmatpush.msra.mxu0 %v491
      %539 = vmatpush.msra.mxu0 %v490
      %540 = vmatpush.msra.mxu0 %v489
      %541 = vmatpush.msra.mxu0 %v488
      %542 = vmatpush.msra.mxu0 %v487
      %543 = vmatpush.msra.mxu0 %v486
      %544 = vmatpush.msra.mxu0 %v485
      %545 = vmatpush.msra.mxu0 %v484
      %546 = vmatpush.msra.mxu0 %v483
      %547 = vmatpush.msra.mxu0 %v482
      %548 = vmatpush.msra.mxu0 %v481
      %549 = vmatpush.msra.mxu0 %v480
      %550 = vmatpush.msra.mxu0 %v479
      %551 = vmatmul.f32.gmra.mxu0 %v446
      %v552 = vpop.f32.mrf.mxu0
      %v553 = vadd.f32 %v533, %v552
      %554 = vdwg.mxu0
      %555 = vst [vmem:[%s423] sm:$0xff] %v553
      %p556 = scmp.lt.s32.totalorder %s21, 0
      %s557 = scalar_select %p556, %s21, 0
      %p558 = scmp.lt.s32.totalorder %s22, 1
      %s559 = scalar_select %p558, %s22, 1
      %s560 = smul.addr %s557, 2
      %s561 = sadd.s32 %s559, %s560
      %s562 = smul.addr %s561, 8
      %s563 = scalar_lea.vmem %s6, %s562
      // Predicated region
      $region45: #{bandpass.1} parent=43 // pred_check
        %p564 = pneg %p218
      $region46: #{bandpass.1} parent=43 // pred_check_branch
        %566 = sbr.rel (%p564) target = $region48
      $region47: #{bandpass.1} parent=43 // pred_region
        _
      $region48: #{bandpass.1} parent=43 // pred_fallthru
        _
    $region44: #{bandpass.1} parent=5 // pred_fallthru
      _
    %p567 = scmp.le.s32.totalorder 2, %s12
    // Predicated region
    $region49: #{bandpass.1} parent=5 // pred_check
      %p568 = pneg %p567
    $region50: #{bandpass.1} parent=5 // pred_check_branch
      %570 = sbr.rel (%p568) target = $region52
    $region51: #{bandpass.1} parent=5 // pred_region
      %s571 = ssub.s32 %s12, 2
      // Predicated region
      $region53: #{bandpass.1} parent=51 // pred_check
        %p572 = pneg %p224
      $region54: #{bandpass.1} parent=51 // pred_check_branch
        %574 = sbr.rel (%p572) target = $region56
      $region55: #{bandpass.1} parent=51 // pred_region
        %p575 = scmp.lt.s32.totalorder %s23, 0
        %s576 = scalar_select %p575, %s23, 0
        %p577 = scmp.lt.s32.totalorder %s24, 1
        %s578 = scalar_select %p577, %s24, 1
        %s579 = smul.addr %s576, 2
        %s580 = sadd.s32 %s578, %s579
        %s581 = smul.addr %s580, 8
        %s582 = scalar_lea.vmem %s6, %s581
      $region56: #{bandpass.1} parent=51 // pred_fallthru
        _
    $region52: #{bandpass.1} parent=5 // pred_fallthru
      _
  $region6: #{bandpass.1} parent=0 // loop_footer
    %s16 = sadd.s32 1, %s12
  $region7: #{bandpass.1} parent=0 // loop_footer_branch
    %11 = sbr.rel target = $region3
  $region8: #{bandpass.1} parent=0 // loop_exit
    _

</llo_original>
